<compile_context>
chip_gen: v6e
topology: v6e:2x2x1
jax: 0.10.0
libtpu: 0.0.40
codegen_flags: <defaults>
</compile_context>

<pallas_src>
import functools

import jax
import jax.numpy as jnp
from jax import lax
from jax.experimental import pallas as pl
from jax.experimental.pallas import tpu as pltpu

_EPS = 1.00005
_LANES = 128
_SUBLANES = 8
_ALIGN = _SUBLANES * _LANES          # 1024 elements = one (8, 128) slab
_CHUNK_ROWS = 256                    # per-iteration chunk: 256x128 f32 = 32 vregs
_MAX_TILE_ROWS = 4096                # 4096x128x4B = 2 MiB / input / pipeline buffer


@functools.lru_cache(maxsize=1)
def _num_tensorcores() -> int:
    """Best-effort TensorCores-per-chip (2 on v7x, 1 on v5e/v6e)."""
    try:
        info = pltpu.get_tpu_info()
    except Exception:
        return 1
    for name in ("num_cores", "core_count", "num_tensorcores",
                 "num_tensor_cores", "tensorcores_per_chip", "cores_per_chip"):
        v = getattr(info, name, None)
        if isinstance(v, int) and 1 <= v <= 16:
            return v
    return 1


def _sq_log_diff(p, a):
    d = (jnp.log(p.astype(jnp.float32) + _EPS)
         - jnp.log(a.astype(jnp.float32) + _EPS))
    return d * d


def _msle_kernel(p_ref, a_ref, o_ref, *, rows_total, tile_rows,
                 tiles_per_partial, chunk_rows, n_chunks, unroll):
    c = pl.program_id(0)     # partial-sum axis ("parallel")
    t = pl.program_id(1)     # tile axis within a partial ("arbitrary" reduction)

    @pl.when(t == 0)
    def _init():
        o_ref[...] = jnp.zeros_like(o_ref)

    # Logical (unclamped) first row of this tile.
    row0 = (c * tiles_per_partial + t) * tile_rows

    def fold(dd):
        # (chunk_rows, 128) -> (8, 128): pure VPU adds, no cross-lane XLU work.
        return jnp.sum(dd.reshape(chunk_rows // _SUBLANES, _SUBLANES, _LANES),
                       axis=0)

    def fast_chunk(i, acc):
        r = pl.multiple_of(i * chunk_rows, _SUBLANES)
        dd = _sq_log_diff(p_ref[pl.ds(r, chunk_rows), :],
                          a_ref[pl.ds(r, chunk_rows), :])
        return acc + fold(dd)

    def masked_chunk(i, acc):
        r = pl.multiple_of(i * chunk_rows, _SUBLANES)
        dd = _sq_log_diff(p_ref[pl.ds(r, chunk_rows), :],
                          a_ref[pl.ds(r, chunk_rows), :])
        row_ids = (row0 + r) + lax.broadcasted_iota(
            jnp.int32, (chunk_rows, _LANES), 0)
        # Mask BEFORE reduction: rows past the array end hold garbage (may be
        # NaN/Inf after the log) and must not reach the accumulator.
        dd = jnp.where(row_ids < rows_total, dd, 0.0)
        return acc + fold(dd)

    zero = jnp.zeros((_SUBLANES, _LANES), jnp.float32)

    # Interior tiles: unmasked fast path.
    @pl.when(row0 + tile_rows <= rows_total)
    def _interior():
        o_ref[...] += lax.fori_loop(0, n_chunks, fast_chunk, zero, unroll=unroll)

    # Ragged last tile: masked path. Fully-clamped duplicate tiles
    # (row0 >= rows_total) fall into neither branch and contribute nothing.
    @pl.when(jnp.logical_and(row0 < rows_total,
                             row0 + tile_rows > rows_total))
    def _tail():
        o_ref[...] += lax.fori_loop(0, n_chunks, masked_chunk, zero,
                                    unroll=unroll)


@jax.jit
def msle_loss(pred, actual):
    assert pred.shape == actual.shape, "pred/actual must have the same shape"
    n = pred.size

    p_flat = pred.reshape(-1)
    a_flat = actual.reshape(-1)

    # Aligned prefix goes through the Pallas kernel; the < 1024-element ragged
    # tail (and tiny inputs) are computed directly -- no full-array jnp.pad.
    n_main = (n // _ALIGN) * _ALIGN
    tail = jnp.float32(0.0)
    if n_main < n:
        tail = jnp.sum(_sq_log_diff(p_flat[n_main:], a_flat[n_main:]))
    if n_main == 0:
        return tail

    rows = n_main // _LANES                      # multiple of 8
    p2 = p_flat[:n_main].reshape(rows, _LANES)
    a2 = a_flat[:n_main].reshape(rows, _LANES)

    if rows >= _CHUNK_ROWS:
        chunk_rows = _CHUNK_ROWS
        tile_rows = min(_MAX_TILE_ROWS, (rows // chunk_rows) * chunk_rows)
    else:
        chunk_rows = rows
        tile_rows = rows
    n_chunks = tile_rows // chunk_rows
    unroll = n_chunks if n_chunks <= 4 else 4

    total_tiles = pl.cdiv(rows, tile_rows)
    cores = _num_tensorcores()
    num_partials = cores if (cores > 1 and total_tiles >= cores) else 1
    tiles_per_partial = pl.cdiv(total_tiles, num_partials)

    def in_index_map(c, t):
        # Clamp so no block origin lands fully outside the array; the kernel
        # skips clamped duplicates and masks the ragged last tile.
        return (jnp.minimum(c * tiles_per_partial + t, total_tiles - 1), 0)

    kernel = functools.partial(
        _msle_kernel,
        rows_total=rows,
        tile_rows=tile_rows,
        tiles_per_partial=tiles_per_partial,
        chunk_rows=chunk_rows,
        n_chunks=n_chunks,
        unroll=unroll,
    )

    in_bytes = n_main * (jnp.dtype(pred.dtype).itemsize
                         + jnp.dtype(actual.dtype).itemsize)
    cost = pl.CostEstimate(
        flops=6 * n_main,
        transcendentals=2 * n_main,
        bytes_accessed=in_bytes + num_partials * _SUBLANES * _LANES * 4)

    out = pl.pallas_call(
        kernel,
        out_shape=jax.ShapeDtypeStruct((num_partials * _SUBLANES, _LANES),
                                       jnp.float32),
        grid_spec=pltpu.PrefetchScalarGridSpec(
            num_scalar_prefetch=0,
            grid=(num_partials, tiles_per_partial),
            in_specs=[
                pl.BlockSpec((tile_rows, _LANES), in_index_map),
                pl.BlockSpec((tile_rows, _LANES), in_index_map),
            ],
            out_specs=pl.BlockSpec((_SUBLANES, _LANES), lambda c, t: (c, 0)),
        ),
        compiler_params=pltpu.CompilerParams(
            dimension_semantics=("parallel", "arbitrary"),
            vmem_limit_bytes=32 * 1024 * 1024,
        ),
        cost_estimate=cost,
    )(p2, a2)

    # Tiny final cross-lane reduce of the per-partial (8, 128) slabs.
    return jnp.sum(out) + tail


if __name__ == "__main__":
    def ref_loss(p, a):
        return jnp.sum((jnp.log(p.astype(jnp.float32) + _EPS)
                        - jnp.log(a.astype(jnp.float32) + _EPS)) ** 2)

    key = jax.random.PRNGKey(0)
    k1, k2 = jax.random.split(key)

    # Primary check: regression-style positive inputs, NCHW (2, 4, 16, 16).
    pred = jax.random.uniform(k1, (2, 4, 16, 16), jnp.float32,
                              minval=0.0, maxval=5.0)
    actual = jax.random.uniform(k2, (2, 4, 16, 16), jnp.float32,
                                minval=0.0, maxval=5.0)
    loss = msle_loss(pred, actual)
    jax.block_until_ready(loss)
    ref = ref_loss(pred, actual)
    assert jnp.allclose(loss, ref, rtol=1e-5, atol=1e-5), (loss, ref)

    # Extra check: non-(8*128)-aligned element count -> kernel prefix + jnp tail.
    k3, k4 = jax.random.split(k1)
    p2 = jax.random.uniform(k3, (2, 3, 70, 129), jnp.float32,
                            minval=0.0, maxval=5.0)
    a2 = jax.random.uniform(k4, (2, 3, 70, 129), jnp.float32,
                            minval=0.0, maxval=5.0)
    assert jnp.allclose(msle_loss(p2, a2), ref_loss(p2, a2),
                        rtol=1e-4, atol=1e-3)

    # Extra check: tiny input (< 1024 elements) -> pure-jnp fast path.
    k5, k6 = jax.random.split(k2)
    p3 = jax.random.uniform(k5, (2, 3, 10, 7), jnp.float32,
                            minval=0.0, maxval=5.0)
    a3 = jax.random.uniform(k6, (2, 3, 10, 7), jnp.float32,
                            minval=0.0, maxval=5.0)
    assert jnp.allclose(msle_loss(p3, a3), ref_loss(p3, a3),
                        rtol=1e-5, atol=1e-5)

    # Extra check: multi-tile grid with an in-kernel ragged (masked) last tile
    # (and, on 2-TensorCore chips, the 2-partial split path).
    k7, k8 = jax.random.split(k3)
    p4 = jax.random.uniform(k7, (8, 16, 64, 65), jnp.float32,
                            minval=0.0, maxval=5.0)
    a4 = jax.random.uniform(k8, (8, 16, 64, 65), jnp.float32,
                            minval=0.0, maxval=5.0)
    assert jnp.allclose(msle_loss(p4, a4), ref_loss(p4, a4),
                        rtol=5e-4, atol=1e-2)

    print("KERNEL_OK")
</pallas_src>

<mosaic_0001>
module attributes {stable_mosaic.version = 11 : i64} {
  func.func @_msle_kernel(%arg0: i32, %arg1: i32, %arg2: memref<16x128xf32, #tpu.memory_space<vmem>>, %arg3: memref<16x128xf32, #tpu.memory_space<vmem>>, %arg4: memref<8x128xf32, #tpu.memory_space<vmem>>) attributes {dimension_semantics = [#tpu.dimension_semantics<parallel>, #tpu.dimension_semantics<arbitrary>], iteration_bounds = array<i64: 1, 1>, scalar_prefetch = 0 : i64, scratch_operands = 0 : i64, tpu.core_type = #tpu.core_type<tc>, window_params = [{transform_indices = @transform_0, window_bounds = array<i64: 16, 128>}, {transform_indices = @transform_1, window_bounds = array<i64: 16, 128>}, {transform_indices = @transform_2, window_bounds = array<i64: 8, 128>}]} {
    %c0_i32 = arith.constant 0 : i32
    %0 = arith.cmpi eq, %arg1, %c0_i32 : i32
    %1 = arith.extui %0 : i1 to i32
    %c0_i32_0 = arith.constant 0 : i32
    %2 = arith.cmpi ne, %1, %c0_i32_0 : i32
    scf.if %2 {
      %cst_8 = arith.constant 0.000000e+00 : f32
      %17 = vector.broadcast %cst_8 : f32 to vector<8x128xf32>
      %c0 = arith.constant 0 : index
      %c0_9 = arith.constant 0 : index
      %18 = vector.load %arg4[%c0, %c0_9] : memref<8x128xf32, #tpu.memory_space<vmem>>, vector<8x128xf32>
      tpu.vector_store %arg4[%c0, %c0_9], %17 {strides = array<i32>} : memref<8x128xf32, #tpu.memory_space<vmem>>, vector<8x128xf32>,
    } else {
    }
    %c1_i32 = arith.constant 1 : i32
    %3 = arith.muli %arg0, %c1_i32 : i32
    %4 = arith.addi %3, %arg1 : i32
    %c16_i32 = arith.constant 16 : i32
    %5 = arith.muli %4, %c16_i32 : i32
    %cst = arith.constant 0.000000e+00 : f32
    %6 = vector.broadcast %cst : f32 to vector<8x128xf32>
    %c16_i32_1 = arith.constant 16 : i32
    %7 = arith.addi %5, %c16_i32_1 : i32
    %c16_i32_2 = arith.constant 16 : i32
    %8 = arith.cmpi sle, %7, %c16_i32_2 : i32
    %9 = arith.extui %8 : i1 to i32
    %c0_i32_3 = arith.constant 0 : i32
    %10 = arith.cmpi ne, %9, %c0_i32_3 : i32
    scf.if %10 {
      %c0 = arith.constant 0 : index
      %c0_8 = arith.constant 0 : index
      %17 = vector.load %arg4[%c0, %c0_8] : memref<8x128xf32, #tpu.memory_space<vmem>>, vector<8x128xf32>
      %c0_i32_9 = arith.constant 0 : i32
      %c16_i32_10 = arith.constant 16 : i32
      %18 = arith.muli %c0_i32_9, %c16_i32_10 : i32
      %19 = tpu.assume_multiple %18, 8 : i32
      %20 = arith.index_cast %19 : i32 to index
      %c0_11 = arith.constant 0 : index
      %21 = vector.load %arg2[%20, %c0_11] : memref<16x128xf32, #tpu.memory_space<vmem>>, vector<16x128xf32>
      %22 = arith.index_cast %19 : i32 to index
      %c0_12 = arith.constant 0 : index
      %23 = vector.load %arg3[%22, %c0_12] : memref<16x128xf32, #tpu.memory_space<vmem>>, vector<16x128xf32>
      %cst_13 = arith.constant 1.000050e+00 : f32
      %24 = vector.broadcast %cst_13 : f32 to vector<16x128xf32>
      %25 = arith.addf %21, %24 : vector<16x128xf32>
      %26 = math.log %25 : vector<16x128xf32>
      %cst_14 = arith.constant 1.000050e+00 : f32
      %27 = vector.broadcast %cst_14 : f32 to vector<16x128xf32>
      %28 = arith.addf %23, %27 : vector<16x128xf32>
      %29 = math.log %28 : vector<16x128xf32>
      %30 = arith.subf %26, %29 : vector<16x128xf32>
      %31 = arith.mulf %30, %30 : vector<16x128xf32>
      %32 = vector.shape_cast %31 : vector<16x128xf32> to vector<2x8x128xf32>
      %cst_15 = arith.constant dense<0.000000e+00> : vector<8x128xf32>
      %33 = vector.multi_reduction <add>, %32, %cst_15 [0] : vector<2x8x128xf32> to vector<8x128xf32>
      %34 = arith.addf %6, %33 : vector<8x128xf32>
      %c1_i32_16 = arith.constant 1 : i32
      %35 = arith.addf %17, %34 : vector<8x128xf32>
      %c0_17 = arith.constant 0 : index
      %c0_18 = arith.constant 0 : index
      %36 = vector.load %arg4[%c0_17, %c0_18] : memref<8x128xf32, #tpu.memory_space<vmem>>, vector<8x128xf32>
      tpu.vector_store %arg4[%c0_17, %c0_18], %35 {strides = array<i32>} : memref<8x128xf32, #tpu.memory_space<vmem>>, vector<8x128xf32>,
    } else {
    }
    %c16_i32_4 = arith.constant 16 : i32
    %11 = arith.cmpi slt, %5, %c16_i32_4 : i32
    %c16_i32_5 = arith.constant 16 : i32
    %12 = arith.addi %5, %c16_i32_5 : i32
    %c16_i32_6 = arith.constant 16 : i32
    %13 = arith.cmpi sgt, %12, %c16_i32_6 : i32
    %14 = arith.andi %11, %13 : i1
    %15 = arith.extui %14 : i1 to i32
    %c0_i32_7 = arith.constant 0 : i32
    %16 = arith.cmpi ne, %15, %c0_i32_7 : i32
    scf.if %16 {
      %c0 = arith.constant 0 : index
      %c0_8 = arith.constant 0 : index
      %17 = vector.load %arg4[%c0, %c0_8] : memref<8x128xf32, #tpu.memory_space<vmem>>, vector<8x128xf32>
      %c0_i32_9 = arith.constant 0 : i32
      %c16_i32_10 = arith.constant 16 : i32
      %18 = arith.muli %c0_i32_9, %c16_i32_10 : i32
      %19 = tpu.assume_multiple %18, 8 : i32
      %20 = arith.index_cast %19 : i32 to index
      %c0_11 = arith.constant 0 : index
      %21 = vector.load %arg2[%20, %c0_11] : memref<16x128xf32, #tpu.memory_space<vmem>>, vector<16x128xf32>
      %22 = arith.index_cast %19 : i32 to index
      %c0_12 = arith.constant 0 : index
      %23 = vector.load %arg3[%22, %c0_12] : memref<16x128xf32, #tpu.memory_space<vmem>>, vector<16x128xf32>
      %cst_13 = arith.constant 1.000050e+00 : f32
      %24 = vector.broadcast %cst_13 : f32 to vector<16x128xf32>
      %25 = arith.addf %21, %24 : vector<16x128xf32>
      %26 = math.log %25 : vector<16x128xf32>
      %cst_14 = arith.constant 1.000050e+00 : f32
      %27 = vector.broadcast %cst_14 : f32 to vector<16x128xf32>
      %28 = arith.addf %23, %27 : vector<16x128xf32>
      %29 = math.log %28 : vector<16x128xf32>
      %30 = arith.subf %26, %29 : vector<16x128xf32>
      %31 = arith.mulf %30, %30 : vector<16x128xf32>
      %32 = arith.addi %5, %19 : i32
      %33 = tpu.iota {dimensions = array<i32: 0>} : vector<16x128xi32>
      %34 = vector.broadcast %32 : i32 to vector<16x128xi32>
      %35 = arith.addi %34, %33 : vector<16x128xi32>
      %c16_i32_15 = arith.constant 16 : i32
      %36 = vector.broadcast %c16_i32_15 : i32 to vector<16x128xi32>
      %37 = arith.cmpi slt, %35, %36 : vector<16x128xi32>
      %cst_16 = arith.constant 0.000000e+00 : f32
      %38 = vector.broadcast %cst_16 : f32 to vector<16x128xf32>
      %39 = arith.select %37, %31, %38 : vector<16x128xi1>, vector<16x128xf32>
      %40 = vector.shape_cast %39 : vector<16x128xf32> to vector<2x8x128xf32>
      %cst_17 = arith.constant dense<0.000000e+00> : vector<8x128xf32>
      %41 = vector.multi_reduction <add>, %40, %cst_17 [0] : vector<2x8x128xf32> to vector<8x128xf32>
      %42 = arith.addf %6, %41 : vector<8x128xf32>
      %c1_i32_18 = arith.constant 1 : i32
      %43 = arith.addf %17, %42 : vector<8x128xf32>
      %c0_19 = arith.constant 0 : index
      %c0_20 = arith.constant 0 : index
      %44 = vector.load %arg4[%c0_19, %c0_20] : memref<8x128xf32, #tpu.memory_space<vmem>>, vector<8x128xf32>
      tpu.vector_store %arg4[%c0_19, %c0_20], %43 {strides = array<i32>} : memref<8x128xf32, #tpu.memory_space<vmem>>, vector<8x128xf32>,
    } else {
    }
    return
  }
  func.func @transform_0(%arg0: i32, %arg1: i32) -> (i32, i32) {
    %c1_i32 = arith.constant 1 : i32
    %0 = arith.muli %arg0, %c1_i32 : i32
    %1 = arith.addi %0, %arg1 : i32
    %c0_i32 = arith.constant 0 : i32
    %2 = arith.minsi %1, %c0_i32 : i32
    %c0_i32_0 = arith.constant 0 : i32
    %c0_i32_1 = arith.constant 0 : i32
    return %2, %c0_i32_0 : i32, i32
  }
  func.func @transform_1(%arg0: i32, %arg1: i32) -> (i32, i32) {
    %c1_i32 = arith.constant 1 : i32
    %0 = arith.muli %arg0, %c1_i32 : i32
    %1 = arith.addi %0, %arg1 : i32
    %c0_i32 = arith.constant 0 : i32
    %2 = arith.minsi %1, %c0_i32 : i32
    %c0_i32_0 = arith.constant 0 : i32
    %c0_i32_1 = arith.constant 0 : i32
    return %2, %c0_i32_0 : i32, i32
  }
  func.func @transform_2(%arg0: i32, %arg1: i32) -> (i32, i32) {
    %c0_i32 = arith.constant 0 : i32
    %c0_i32_0 = arith.constant 0 : i32
    return %arg0, %c0_i32 : i32, i32
  }
}

</mosaic_0001>

<llo_original>
// kernel: msle_loss.1
$region0: #{msle_loss.1}
  #allocation0 [shape = 'u32[]', space=smem, size = 0x4, offset = 0x4, fixed_abs, tag = 'smem constant byte address 0x4 - core index']
  #allocation1 [shape = 'u32[144,128]{1,0:T(1,128)}', space=vmem, size = 0x12000, scoped, tag = 'internal scratch']
  %s0 = inlined_call_operand.vmem [shape: f32[16,128], index: 0, kind: input, shape index: {}]
  %s1 = inlined_call_operand.vmem [shape: f32[16,128], index: 1, kind: input, shape index: {}]
  %s2 = inlined_call_operand.vmem [shape: f32[8,128], index: 2, kind: output, shape index: {}]
  %s3 = sld [smem:[#allocation0]]
  $region30: #{msle_loss.1} parent=0
    _
  %s5 = ssub.s32 1, %s3
  %s6 = scalar_select 0, %s5, %s3
  // Predicated region
  $region2: #{msle_loss.1} parent=0 // pred_check
    _
  $region3: #{msle_loss.1} parent=0 // pred_check_branch
    %8 = sbr.rel (0) target = $region5
  $region4: #{msle_loss.1} parent=0 // pred_region
    %s9 = sadd.s32 0, 0
    %p10 = scmp.lt.s32.totalorder %s9, 0
    %s11 = scalar_select %p10, %s9, 0
    %s12 = smul.u32 2, %s11
    %p13 = scmp.lt.s32.totalorder %s12, 1
    %s14 = scalar_select %p13, %s12, 1
    %s15 = smul.addr %s14, 8
    %s16 = scalar_lea.vmem %s0, %s15
    %s17 = sadd.s32 0, 0
    %p18 = scmp.lt.s32.totalorder %s17, 0
    %s19 = scalar_select %p18, %s17, 0
    %s20 = smul.u32 2, %s19
  $region5: #{msle_loss.1} parent=0 // pred_fallthru
    _
  // Predicated region
  $region6: #{msle_loss.1} parent=0 // pred_check
    _
  $region7: #{msle_loss.1} parent=0 // pred_check_branch
    %22 = sbr.rel (0) target = $region9
  $region8: #{msle_loss.1} parent=0 // pred_region
    %s23 = sadd.s32 0, 0
    %p24 = scmp.lt.s32.totalorder %s23, 0
    %s25 = scalar_select %p24, %s23, 0
    %s26 = smul.u32 2, %s25
    %p27 = scmp.lt.s32.totalorder %s26, 1
    %s28 = scalar_select %p27, %s26, 1
    %s29 = smul.addr %s28, 8
    %s30 = scalar_lea.vmem %s1, %s29
    %s31 = sadd.s32 0, 0
    %p32 = scmp.lt.s32.totalorder %s31, 0
    %s33 = scalar_select %p32, %s31, 0
    %s34 = smul.u32 2, %s33
  $region9: #{msle_loss.1} parent=0 // pred_fallthru
    _
  %s35 = sadd.s32 0, 0
  %p36 = scmp.lt.s32.totalorder %s35, 0
  %s37 = scalar_select %p36, %s35, 0
  %s38 = smul.u32 2, %s37
  %p39 = scmp.lt.s32.totalorder %s38, 1
  %s40 = scalar_select %p39, %s38, 1
  %s41 = smul.addr %s40, 8
  %s42 = scalar_lea.vmem %s0, %s41
  %s43 = sadd.s32 0, 0
  %p44 = scmp.lt.s32.totalorder %s43, 0
  %s45 = scalar_select %p44, %s43, 0
  %s46 = smul.u32 2, %s45
  %p47 = scmp.lt.s32.totalorder %s46, 1
  %s48 = scalar_select %p47, %s46, 1
  %s49 = smul.addr %s48, 8
  %s50 = scalar_lea.vmem %s1, %s49
  %s51 = sadd.s32 0, 0
  %p52 = scmp.lt.s32.totalorder %s51, 0
  %s53 = scalar_select %p52, %s51, 0
  %s54 = smul.u32 2, %s53
  %p55 = scmp.lt.s32.totalorder %s54, 1
  %s56 = scalar_select %p55, %s54, 1
  %s57 = smul.addr %s56, 8
  %s58 = scalar_lea.vmem %s0, %s57
  %s59 = sadd.s32 0, 0
  %p60 = scmp.lt.s32.totalorder %s59, 0
  %s61 = scalar_select %p60, %s59, 0
  %s62 = smul.u32 2, %s61
  %s63 = sadd.s32 0, 0
  %p64 = scmp.lt.s32.totalorder %s63, 0
  %s65 = scalar_select %p64, %s63, 0
  %s66 = smul.u32 2, %s65
  %p67 = scmp.lt.s32.totalorder %s66, 1
  %s68 = scalar_select %p67, %s66, 1
  %s69 = smul.addr %s68, 8
  %s70 = scalar_lea.vmem %s1, %s69
  %s71 = sadd.s32 0, 0
  %p72 = scmp.lt.s32.totalorder %s71, 0
  %s73 = scalar_select %p72, %s71, 0
  %s74 = smul.u32 2, %s73
  %p75 = scmp.eq.s32.totalorder 0, 0
  // Predicated region
  $region10: #{msle_loss.1} parent=0 // pred_check
    %p76 = pneg %p75
  $region11: #{msle_loss.1} parent=0 // pred_check_branch
    %78 = sbr.rel (%p76) target = $region13
  $region12: #{msle_loss.1} parent=0 // pred_region
    %79 = vst [vmem:[%s2] sm:$0xff] 0.0
  $region13: #{msle_loss.1} parent=0 // pred_fallthru
    _
  %s80 = sadd.s32 0, 0
  %s81 = smul.u32 %s80, 16
  %s82 = sadd.s32 %s81, 16
  %p83 = scmp.le.s32.totalorder %s82, 16
  // Predicated region
  $region14: #{msle_loss.1} parent=0 // pred_check
    %p84 = pneg %p83
  $region15: #{msle_loss.1} parent=0 // pred_check_branch
    %86 = sbr.rel (%p84) target = $region17
  $region16: #{msle_loss.1} parent=0 // pred_region
    %v87 = vld [vmem:[%s2] sm:$0xff]
    %v88 = vld [vmem:[%s58] sm:$0xff]
    %v89 = vld [vmem:[%s58 + $0x8] sm:$0xff]
    %v90 = vld [vmem:[%s70] sm:$0xff]
    %v91 = vld [vmem:[%s70 + $0x8] sm:$0xff]
    %v92 = vadd.f32 %v88, 1.00005
    %v93 = vadd.f32 %v89, 1.00005
    %v94 = vlog2.pop %v92
    %v95 = vmul.f32 %v94, 0.6931472
    %v96 = vlog2.pop %v93
    %v97 = vmul.f32 %v96, 0.6931472
    %v98 = vadd.f32 %v90, 1.00005
    %v99 = vadd.f32 %v91, 1.00005
    %v100 = vlog2.pop %v98
    %v101 = vmul.f32 %v100, 0.6931472
    %v102 = vlog2.pop %v99
    %v103 = vmul.f32 %v102, 0.6931472
    %v104 = vsub.f32 %v95, %v101
    %v105 = vsub.f32 %v97, %v103
    %v106 = vmul.f32 %v104, %v104
    %v107 = vmul.f32 %v105, %v105
    %v108 = vadd.f32 %v106, %v107
    %v109 = vadd.f32 %v108, 0.0
    %v110 = vadd.f32 %v87, %v109
    %111 = vst [vmem:[%s2] sm:$0xff] %v110
  $region17: #{msle_loss.1} parent=0 // pred_fallthru
    _
  %p112 = scmp.lt.s32.totalorder %s81, 16
  %p113 = scmp.gt.s32.totalorder %s82, 16
  %p114 = pnand %p112, %p113
  %p115 = pneg %p114
  // Predicated region
  $region18: #{msle_loss.1} parent=0 // pred_check
    _
  $region19: #{msle_loss.1} parent=0 // pred_check_branch
    %117 = sbr.rel (%p114) target = $region21
  $region20: #{msle_loss.1} parent=0 // pred_region
    %v118 = vld [vmem:[%s2] sm:$0xff]
    %v119 = vld [vmem:[%s58] sm:$0xff]
    %v120 = vld [vmem:[%s58 + $0x8] sm:$0xff]
    %v121 = vld [vmem:[%s70] sm:$0xff]
    %v122 = vld [vmem:[%s70 + $0x8] sm:$0xff]
    %v123 = vadd.f32 %v119, 1.00005
    %v124 = vadd.f32 %v120, 1.00005
    %v125 = vlog2.pop %v123
    %v126 = vmul.f32 %v125, 0.6931472
    %v127 = vlog2.pop %v124
    %v128 = vmul.f32 %v127, 0.6931472
    %v129 = vadd.f32 %v121, 1.00005
    %v130 = vadd.f32 %v122, 1.00005
    %v131 = vlog2.pop %v129
    %v132 = vmul.f32 %v131, 0.6931472
    %v133 = vlog2.pop %v130
    %v134 = vmul.f32 %v133, 0.6931472
    %v135 = vsub.f32 %v126, %v132
    %v136 = vsub.f32 %v128, %v134
    %v137 = vmul.f32 %v135, %v135
    %v138 = vmul.f32 %v136, %v136
    %s139 = sadd.s32 %s81, 0
    %v140 = vlaneseq
    %v141 = vshrl.u32 %v140, 7
    %v142 = vadd.s32 %v141, 8
    %v143 = vstv %s139
    %v144 = vadd.s32 %v143, %v141
    %v145 = vadd.s32 %v143, %v142
    %vm146 = vcmp.lt.s32.totalorder %v144, 16
    %vm147 = vcmp.lt.s32.totalorder %v145, 16
    %v148 = vsel %vm146, %v137, 0.0
    %v149 = vsel %vm147, %v138, 0.0
    %v150 = vadd.f32 %v148, %v149
    %v151 = vadd.f32 %v150, 0.0
    %v152 = vadd.f32 %v118, %v151
    %153 = vst [vmem:[%s2] sm:$0xff] %v152
  $region21: #{msle_loss.1} parent=0 // pred_fallthru
    _
  // Predicated region
  $region22: #{msle_loss.1} parent=0 // pred_check
    _
  $region23: #{msle_loss.1} parent=0 // pred_check_branch
    %155 = sbr.rel (0) target = $region25
  $region24: #{msle_loss.1} parent=0 // pred_region
    _
  $region25: #{msle_loss.1} parent=0 // pred_fallthru
    _
  // Predicated region
  $region26: #{msle_loss.1} parent=0 // pred_check
    _
  $region27: #{msle_loss.1} parent=0 // pred_check_branch
    %157 = sbr.rel (0) target = $region29
  $region28: #{msle_loss.1} parent=0 // pred_region
    _
  $region29: #{msle_loss.1} parent=0 // pred_fallthru
    _

</llo_original>
